<compile_context>
chip_gen: v6e
topology: v6e:2x2x1
jax: 0.10.0
libtpu: 0.0.40
codegen_flags: <defaults>
</compile_context>

<pallas_src>
import functools
import math

import jax
import jax.numpy as jnp
from jax.experimental import pallas as pl
from jax.experimental.pallas import tpu as pltpu

_VMEM_LIMIT = 32 * 1024 * 1024  # explicit scoped VMEM limit, safe on v5e/v6e/v7x


def reloc_ae_kernel(loc_ref, gx_ref, gz_ref, x_ref, we_ref, be_ref, wd_ref, bd_ref,
                    recon_ref, mu_ref, *, n_time, n_chan, store_group):
    T, C = n_time, n_chan

    # ---------- encode: one fused (TB, T*C) @ (T*C, L) matmul ----------
    h = jnp.dot(x_ref[...], we_ref[...], preferred_element_type=jnp.float32)
    h = h + be_ref[...].astype(jnp.float32)                       # (TB, L) f32
    mu_ref[...] = h

    # ---------- decode: one fused (TB, L) @ (L, T*C) matmul ----------
    wf = jnp.dot(h.astype(wd_ref.dtype), wd_ref[...],
                 preferred_element_type=jnp.float32)
    wf = wf + bd_ref[...].astype(jnp.float32)                     # (TB, T*C) f32

    # ---------- ptp over time: binary tree fold (log2(T) steps) ----------
    mx = wf
    mn = wf
    n = T
    while n > 1:
        half = n // 2
        new_mx = jnp.maximum(mx[:, :half * C], mx[:, half * C:2 * half * C])
        new_mn = jnp.minimum(mn[:, :half * C], mn[:, half * C:2 * half * C])
        if n % 2:  # fold the odd tail time-block into the first channel block
            tail_mx = mx[:, 2 * half * C:n * C]
            tail_mn = mn[:, 2 * half * C:n * C]
            head_mx = jnp.maximum(new_mx[:, :C], tail_mx)
            head_mn = jnp.minimum(new_mn[:, :C], tail_mn)
            if half > 1:
                new_mx = jnp.concatenate([head_mx, new_mx[:, C:]], axis=1)
                new_mn = jnp.concatenate([head_mn, new_mn[:, C:]], axis=1)
            else:
                new_mx, new_mn = head_mx, head_mn
        mx, mn = new_mx, new_mn
        n = half
    output_ptp = mx - mn                                          # (TB, C)

    # ---------- relocation (analytical alpha, non-dipole), all f32 ----------
    xb = loc_ref[:, 0:1]                                          # (TB, 1)
    ly = loc_ref[:, 1:2]                                          # (TB, 1)
    zb = loc_ref[:, 2:3]                                          # (TB, 1)
    gx = gx_ref[...]                                              # (1, C)
    gz = gz_ref[...]                                              # (1, C)

    d2 = (jnp.exp(2.0 * ly) + 0.01
          + jnp.square(gx - xb) + jnp.square(gz - zb))            # (TB, C)
    q = jax.lax.rsqrt(d2)                                         # 1/d, one EUP op
    alpha = (jnp.sum(output_ptp * q, axis=1, keepdims=True)
             / jnp.sum(q * q, axis=1, keepdims=True))             # (TB, 1)
    # NOTE: matches the PyTorch reference - divides by output_ptp with no eps guard.
    scale = alpha * q / output_ptp                                # (TB, C)

    # ---------- fuse scaling into lane-aligned chunked recon stores ----------
    g = store_group                                               # g*C % 128 == 0 (or g == T)
    scale_g = jnp.tile(scale, (1, g))                             # hoisted once, (TB, g*C)
    n_full = T // g
    for i in range(n_full):
        lo = i * g * C
        recon_ref[:, lo:lo + g * C] = (wf[:, lo:lo + g * C] * scale_g
                                       ).astype(recon_ref.dtype)
    rem = T - n_full * g
    if rem:
        lo = n_full * g * C
        recon_ref[:, lo:lo + rem * C] = (wf[:, lo:lo + rem * C]
                                         * scale_g[:, :rem * C]
                                         ).astype(recon_ref.dtype)


def _round_up(x, m):
    return ((x + m - 1) // m) * m


def _pick_store_group(T, C):
    # Smallest group of time steps whose lane width is a multiple of 128, then
    # grow it (fewer, wider aligned stores) up to ~1024 lanes or the full T.
    g = 128 // math.gcd(C, 128)
    while 2 * g <= T and 2 * g * C <= 1024:
        g *= 2
    return min(g, T)


def _pick_batch_tile(B, TC, L, in_bytes, out_bytes):
    # Per-batch-row VMEM per grid step: double-buffered x & recon tiles, f32 wf
    # plus tree-fold temporaries, and tiny loc/mu tiles.
    per_row = 2 * TC * (in_bytes + out_bytes) + 4 * TC * 4 + 2 * (L + 3) * 4
    # Resident operands (We, Wd, bd, be, gx, gz) also get double-buffered copies
    # (we do not use pl.Buffered(1)), so charge them against the budget.
    resident = 2 * (2 * TC * L * in_bytes + TC * 4 + 3 * 128 * 4)
    budget = int(0.45 * _VMEM_LIMIT) - resident
    tb = max(budget, per_row) // per_row
    tb = min(max((tb // 16) * 16, 16), 2048)          # multiple of 16 (bf16-safe)
    # Megacore: guarantee >=2 (prefer >=4) grid steps when the batch allows it,
    # so the "parallel" grid axis can shard across both v7x TensorCores.
    if B >= 64:
        tb = min(tb, _round_up(pl.cdiv(B, 4), 16))
    elif B >= 32:
        tb = min(tb, _round_up(pl.cdiv(B, 2), 16))
    # Never pad a tiny batch beyond a single tile.
    tb = min(tb, _round_up(B, 16))
    return max(tb, 16)


def reloc_ae_forward(x, loc, local_geom, We, be, Wd, bd, *,
                     use_bf16=True, recon_dtype=jnp.float32):
    """Returns (recon_x, mu, logvar=None) matching RelocAE.forward semantics."""
    B, T, C = x.shape
    L = We.shape[-1]
    TC = T * C

    mm_dtype = jnp.bfloat16 if use_bf16 else jnp.float32   # bf16 halves x/We/Wd HBM traffic

    # Host-side flatten/transpose so the kernel sees two full-width matmuls and
    # a lane-dense recon slab.
    x_flat = x.reshape(B, TC).astype(mm_dtype)
    We_flat = We.reshape(TC, L).astype(mm_dtype)                           # We[t,c,l] -> [t*C+c, l]
    Wd_flat = jnp.transpose(Wd, (1, 0, 2)).reshape(L, TC).astype(mm_dtype)  # Wd[t,l,c] -> [l, t*C+c]
    bd_flat = bd.reshape(1, TC).astype(jnp.float32)
    gx = local_geom[:, 0].reshape(1, C).astype(jnp.float32)
    gz = local_geom[:, 1].reshape(1, C).astype(jnp.float32)
    loc = loc.astype(jnp.float32)
    be = be.reshape(1, L).astype(jnp.float32)

    in_bytes = jnp.dtype(mm_dtype).itemsize
    out_bytes = jnp.dtype(recon_dtype).itemsize
    TB = _pick_batch_tile(B, TC, L, in_bytes, out_bytes)

    # Pad batch to a multiple of TB (padded rows are discarded after the call).
    B_pad = _round_up(B, TB)
    if B_pad != B:
        x_flat = jnp.pad(x_flat, ((0, B_pad - B), (0, 0)))
        loc = jnp.pad(loc, ((0, B_pad - B), (0, 0)))
    grid = (B_pad // TB,)

    kernel = functools.partial(reloc_ae_kernel, n_time=T, n_chan=C,
                               store_group=_pick_store_group(T, C))

    cost = pl.CostEstimate(
        flops=4 * B_pad * TC * L + 8 * B_pad * TC,
        transcendentals=B_pad * (C + 1),
        bytes_accessed=(B_pad * TC * (in_bytes + out_bytes)
                        + B_pad * (L + 3) * 4
                        + 2 * TC * L * in_bytes + TC * 4 + (2 * C + L) * 4))

    recon_flat, mu = pl.pallas_call(
        kernel,
        out_shape=(jax.ShapeDtypeStruct((B_pad, TC), recon_dtype),
                   jax.ShapeDtypeStruct((B_pad, L), jnp.float32)),
        grid=grid,
        in_specs=[
            pl.BlockSpec((TB, 3), lambda b: (b, 0)),             # loc   (batch-tiled)
            pl.BlockSpec((1, C), lambda b: (0, 0)),              # gx    (resident)
            pl.BlockSpec((1, C), lambda b: (0, 0)),              # gz    (resident)
            pl.BlockSpec((TB, TC), lambda b: (b, 0)),            # x     (batch-tiled)
            pl.BlockSpec((TC, L), lambda b: (0, 0)),             # We    (resident)
            pl.BlockSpec((1, L), lambda b: (0, 0)),              # be    (resident)
            pl.BlockSpec((L, TC), lambda b: (0, 0)),             # Wd    (resident)
            pl.BlockSpec((1, TC), lambda b: (0, 0)),             # bd    (resident)
        ],
        out_specs=(pl.BlockSpec((TB, TC), lambda b: (b, 0)),     # recon (lane-dense)
                   pl.BlockSpec((TB, L), lambda b: (b, 0))),     # mu
        compiler_params=pltpu.CompilerParams(
            dimension_semantics=("parallel",),                   # shard batch tiles across TCs
            vmem_limit_bytes=_VMEM_LIMIT),
        cost_estimate=cost,
    )(loc, gx, gz, x_flat, We_flat, be, Wd_flat, bd_flat)

    return recon_flat[:B].reshape(B, T, C), mu[:B], None


def reloc_ae_ref(x, loc, local_geom, We, be, Wd, bd):
    """Pure-JAX reference (mirrors the PyTorch forward)."""
    h = jnp.einsum('btc,tcl->bl', x, We) + be[0]
    wf = jnp.einsum('bl,tlc->btc', h, Wd) + bd[:, 0, :][None]
    ptp = wf.max(axis=1) - wf.min(axis=1)
    xs, ly, zs = loc[:, 0], loc[:, 1], loc[:, 2]
    d = jnp.sqrt(jnp.exp(2.0 * ly)[:, None] + 0.01
                 + jnp.square(local_geom[None, :, 0] - xs[:, None])
                 + jnp.square(local_geom[None, :, 1] - zs[:, None]))
    q = 1.0 / d
    alpha = (ptp * q).sum(1) / (q * q).sum(1)
    target = alpha[:, None] * q
    return wf * (target / ptp)[:, None, :], h


if __name__ == "__main__":
    B, T, C, L = 2, 8, 16, 2   # batch, time samples, channels, latent_dim

    key = jax.random.PRNGKey(0)
    k_x, k_loc, k_we, k_be, k_wd, k_bd = jax.random.split(key, 6)

    # deterministic inputs
    x = jax.random.normal(k_x, (B, T, C), dtype=jnp.float32)
    loc = jnp.stack([
        jax.random.uniform(k_loc, (B,), minval=0.0, maxval=25.0),                         # x
        jax.random.normal(jax.random.fold_in(k_loc, 1), (B,)) * 0.3 + 2.0,                # log_y
        jax.random.uniform(jax.random.fold_in(k_loc, 2), (B,), minval=0.0, maxval=100.0), # z
    ], axis=1).astype(jnp.float32)                                                        # (B, 3)

    # deterministic local probe geometry (C, 2): alternating x columns, increasing z
    geom_x = jnp.where(jnp.arange(C) % 2 == 0, 0.0, 25.0)
    geom_z = 20.0 * (jnp.arange(C) // 2).astype(jnp.float32)
    local_geom = jnp.stack([geom_x, geom_z], axis=1).astype(jnp.float32)

    # deterministic parameters (encoder Linear(T*C->L), decoder Linear(L->T*C))
    We = jax.random.normal(k_we, (T, C, L), dtype=jnp.float32) * 0.1
    be = jax.random.normal(k_be, (1, L), dtype=jnp.float32) * 0.1
    Wd = jax.random.normal(k_wd, (T, L, C), dtype=jnp.float32) * 0.1
    bd = jax.random.normal(k_bd, (T, 1, C), dtype=jnp.float32) * 0.1

    recon_gold, mu_gold = reloc_ae_ref(x, loc, local_geom, We, be, Wd, bd)

    # f32 path: strict check against the f32 reference.
    recon, mu, logvar = reloc_ae_forward(x, loc, local_geom, We, be, Wd, bd,
                                         use_bf16=False)
    jax.block_until_ready((recon, mu))
    assert jnp.allclose(mu, mu_gold, rtol=1e-3, atol=1e-3), "mu mismatch (f32)"
    assert jnp.allclose(recon, recon_gold, rtol=1e-3, atol=1e-3), "recon mismatch (f32)"
    assert logvar is None

    # default bf16-I/O path: bf16 matmul operands (f32 accumulate) -> loose check.
    recon_bf, mu_bf, _ = reloc_ae_forward(x, loc, local_geom, We, be, Wd, bd)
    jax.block_until_ready((recon_bf, mu_bf))
    assert jnp.allclose(mu_bf, mu_gold, rtol=5e-2, atol=5e-2), "mu mismatch (bf16)"
    assert jnp.allclose(recon_bf, recon_gold, rtol=1e-1, atol=1e-1), "recon mismatch (bf16)"

    print("KERNEL_OK")
</pallas_src>

<mosaic_0001>
module attributes {stable_mosaic.version = 11 : i64} {
  func.func @reloc_ae_kernel(%arg0: i32, %arg1: memref<16x3xf32, #tpu.memory_space<vmem>>, %arg2: memref<1x16xf32, #tpu.memory_space<vmem>>, %arg3: memref<1x16xf32, #tpu.memory_space<vmem>>, %arg4: memref<16x128xf32, #tpu.memory_space<vmem>>, %arg5: memref<128x2xf32, #tpu.memory_space<vmem>>, %arg6: memref<1x2xf32, #tpu.memory_space<vmem>>, %arg7: memref<2x128xf32, #tpu.memory_space<vmem>>, %arg8: memref<1x128xf32, #tpu.memory_space<vmem>>, %arg9: memref<16x128xf32, #tpu.memory_space<vmem>>, %arg10: memref<16x2xf32, #tpu.memory_space<vmem>>) attributes {dimension_semantics = [#tpu.dimension_semantics<parallel>], iteration_bounds = array<i64: 1>, scalar_prefetch = 0 : i64, scratch_operands = 0 : i64, tpu.core_type = #tpu.core_type<tc>, window_params = [{transform_indices = @transform_0, window_bounds = array<i64: 16, 3>}, {pipeline_mode = #tpu.pipeline_mode<synchronous>, transform_indices = @transform_1, window_bounds = array<i64: 1, 16>}, {pipeline_mode = #tpu.pipeline_mode<synchronous>, transform_indices = @transform_2, window_bounds = array<i64: 1, 16>}, {transform_indices = @transform_3, window_bounds = array<i64: 16, 128>}, {pipeline_mode = #tpu.pipeline_mode<synchronous>, transform_indices = @transform_4, window_bounds = array<i64: 128, 2>}, {pipeline_mode = #tpu.pipeline_mode<synchronous>, transform_indices = @transform_5, window_bounds = array<i64: 1, 2>}, {pipeline_mode = #tpu.pipeline_mode<synchronous>, transform_indices = @transform_6, window_bounds = array<i64: 2, 128>}, {pipeline_mode = #tpu.pipeline_mode<synchronous>, transform_indices = @transform_7, window_bounds = array<i64: 1, 128>}, {transform_indices = @transform_8, window_bounds = array<i64: 16, 128>}, {transform_indices = @transform_9, window_bounds = array<i64: 16, 2>}]} {
    %c0 = arith.constant 0 : index
    %c0_0 = arith.constant 0 : index
    %0 = vector.load %arg4[%c0, %c0_0] : memref<16x128xf32, #tpu.memory_space<vmem>>, vector<16x128xf32>
    %c0_1 = arith.constant 0 : index
    %c0_2 = arith.constant 0 : index
    %1 = vector.load %arg5[%c0_1, %c0_2] : memref<128x2xf32, #tpu.memory_space<vmem>>, vector<128x2xf32>
    %cst = arith.constant dense<0.000000e+00> : vector<16x2xf32>
    %2 = tpu.matmul %0, %1, %cst {dimension_numbers = #tpu.dot_dimension_numbers<[1], [0], [0], [1], [0, 0, 1, 1], [], []>} : vector<16x128xf32>, vector<128x2xf32>, vector<16x2xf32> -> vector<16x2xf32>
    %c0_3 = arith.constant 0 : index
    %c0_4 = arith.constant 0 : index
    %3 = vector.load %arg6[%c0_3, %c0_4] : memref<1x2xf32, #tpu.memory_space<vmem>>, vector<1x2xf32>
    %4 = vector.broadcast %3 : vector<1x2xf32> to vector<16x2xf32>
    %5 = arith.addf %2, %4 : vector<16x2xf32>
    %c0_5 = arith.constant 0 : index
    %c0_6 = arith.constant 0 : index
    %6 = vector.load %arg10[%c0_5, %c0_6] : memref<16x2xf32, #tpu.memory_space<vmem>>, vector<16x2xf32>
    tpu.vector_store %arg10[%c0_5, %c0_6], %5 {strides = array<i32>} : memref<16x2xf32, #tpu.memory_space<vmem>>, vector<16x2xf32>,
    %c0_7 = arith.constant 0 : index
    %c0_8 = arith.constant 0 : index
    %7 = vector.load %arg7[%c0_7, %c0_8] : memref<2x128xf32, #tpu.memory_space<vmem>>, vector<2x128xf32>
    %cst_9 = arith.constant dense<0.000000e+00> : vector<16x128xf32>
    %8 = tpu.matmul %5, %7, %cst_9 {dimension_numbers = #tpu.dot_dimension_numbers<[1], [0], [0], [1], [0, 0, 1, 1], [], []>} : vector<16x2xf32>, vector<2x128xf32>, vector<16x128xf32> -> vector<16x128xf32>
    %c0_10 = arith.constant 0 : index
    %c0_11 = arith.constant 0 : index
    %9 = vector.load %arg8[%c0_10, %c0_11] : memref<1x128xf32, #tpu.memory_space<vmem>>, vector<1x128xf32>
    %10 = vector.broadcast %9 : vector<1x128xf32> to vector<16x128xf32>
    %11 = arith.addf %8, %10 : vector<16x128xf32>
    %12 = vector.extract_strided_slice %11 {offsets = [0, 0], sizes = [16, 64], strides = [1, 1]} : vector<16x128xf32> to vector<16x64xf32>
    %13 = vector.extract_strided_slice %11 {offsets = [0, 64], sizes = [16, 64], strides = [1, 1]} : vector<16x128xf32> to vector<16x64xf32>
    %14 = arith.maximumf %12, %13 : vector<16x64xf32>
    %15 = vector.extract_strided_slice %11 {offsets = [0, 0], sizes = [16, 64], strides = [1, 1]} : vector<16x128xf32> to vector<16x64xf32>
    %16 = vector.extract_strided_slice %11 {offsets = [0, 64], sizes = [16, 64], strides = [1, 1]} : vector<16x128xf32> to vector<16x64xf32>
    %17 = arith.minimumf %15, %16 : vector<16x64xf32>
    %18 = vector.extract_strided_slice %14 {offsets = [0, 0], sizes = [16, 32], strides = [1, 1]} : vector<16x64xf32> to vector<16x32xf32>
    %19 = vector.extract_strided_slice %14 {offsets = [0, 32], sizes = [16, 32], strides = [1, 1]} : vector<16x64xf32> to vector<16x32xf32>
    %20 = arith.maximumf %18, %19 : vector<16x32xf32>
    %21 = vector.extract_strided_slice %17 {offsets = [0, 0], sizes = [16, 32], strides = [1, 1]} : vector<16x64xf32> to vector<16x32xf32>
    %22 = vector.extract_strided_slice %17 {offsets = [0, 32], sizes = [16, 32], strides = [1, 1]} : vector<16x64xf32> to vector<16x32xf32>
    %23 = arith.minimumf %21, %22 : vector<16x32xf32>
    %24 = vector.extract_strided_slice %20 {offsets = [0, 0], sizes = [16, 16], strides = [1, 1]} : vector<16x32xf32> to vector<16x16xf32>
    %25 = vector.extract_strided_slice %20 {offsets = [0, 16], sizes = [16, 16], strides = [1, 1]} : vector<16x32xf32> to vector<16x16xf32>
    %26 = arith.maximumf %24, %25 : vector<16x16xf32>
    %27 = vector.extract_strided_slice %23 {offsets = [0, 0], sizes = [16, 16], strides = [1, 1]} : vector<16x32xf32> to vector<16x16xf32>
    %28 = vector.extract_strided_slice %23 {offsets = [0, 16], sizes = [16, 16], strides = [1, 1]} : vector<16x32xf32> to vector<16x16xf32>
    %29 = arith.minimumf %27, %28 : vector<16x16xf32>
    %30 = arith.subf %26, %29 : vector<16x16xf32>
    %c0_12 = arith.constant 0 : index
    %c0_13 = arith.constant 0 : index
    %31 = vector.load %arg1[%c0_12, %c0_13] : memref<16x3xf32, #tpu.memory_space<vmem>>, vector<16x1xf32>
    %c0_14 = arith.constant 0 : index
    %c1 = arith.constant 1 : index
    %32 = vector.load %arg1[%c0_14, %c1] : memref<16x3xf32, #tpu.memory_space<vmem>>, vector<16x1xf32>
    %c0_15 = arith.constant 0 : index
    %c2 = arith.constant 2 : index
    %33 = vector.load %arg1[%c0_15, %c2] : memref<16x3xf32, #tpu.memory_space<vmem>>, vector<16x1xf32>
    %c0_16 = arith.constant 0 : index
    %c0_17 = arith.constant 0 : index
    %34 = vector.load %arg2[%c0_16, %c0_17] : memref<1x16xf32, #tpu.memory_space<vmem>>, vector<1x16xf32>
    %c0_18 = arith.constant 0 : index
    %c0_19 = arith.constant 0 : index
    %35 = vector.load %arg3[%c0_18, %c0_19] : memref<1x16xf32, #tpu.memory_space<vmem>>, vector<1x16xf32>
    %cst_20 = arith.constant 2.000000e+00 : f32
    %36 = vector.broadcast %cst_20 : f32 to vector<16x1xf32>
    %37 = arith.mulf %36, %32 : vector<16x1xf32>
    %38 = math.exp %37 : vector<16x1xf32>
    %cst_21 = arith.constant 0.00999999977 : f32
    %39 = vector.broadcast %cst_21 : f32 to vector<16x1xf32>
    %40 = arith.addf %38, %39 : vector<16x1xf32>
    %41 = vector.broadcast %34 : vector<1x16xf32> to vector<16x16xf32>
    %42 = vector.broadcast %31 : vector<16x1xf32> to vector<16x16xf32>
    %43 = arith.subf %41, %42 : vector<16x16xf32>
    %44 = arith.mulf %43, %43 : vector<16x16xf32>
    %45 = vector.broadcast %40 : vector<16x1xf32> to vector<16x16xf32>
    %46 = arith.addf %45, %44 : vector<16x16xf32>
    %47 = vector.broadcast %35 : vector<1x16xf32> to vector<16x16xf32>
    %48 = vector.broadcast %33 : vector<16x1xf32> to vector<16x16xf32>
    %49 = arith.subf %47, %48 : vector<16x16xf32>
    %50 = arith.mulf %49, %49 : vector<16x16xf32>
    %51 = arith.addf %46, %50 : vector<16x16xf32>
    %52 = math.rsqrt %51 : vector<16x16xf32>
    %53 = arith.mulf %30, %52 : vector<16x16xf32>
    %cst_22 = arith.constant dense<0.000000e+00> : vector<16xf32>
    %54 = vector.multi_reduction <add>, %53, %cst_22 [1] : vector<16x16xf32> to vector<16xf32>
    %55 = vector.shape_cast %54 : vector<16xf32> to vector<16x1xf32>
    %56 = arith.mulf %52, %52 : vector<16x16xf32>
    %cst_23 = arith.constant dense<0.000000e+00> : vector<16xf32>
    %57 = vector.multi_reduction <add>, %56, %cst_23 [1] : vector<16x16xf32> to vector<16xf32>
    %58 = vector.shape_cast %57 : vector<16xf32> to vector<16x1xf32>
    %59 = arith.divf %55, %58 : vector<16x1xf32>
    %60 = vector.broadcast %59 : vector<16x1xf32> to vector<16x16xf32>
    %61 = arith.mulf %60, %52 : vector<16x16xf32>
    %62 = arith.divf %61, %30 : vector<16x16xf32>
    %63 = tpu.concatenate %62, %62, %62, %62, %62, %62, %62, %62 in 1 : vector<16x16xf32>, vector<16x16xf32>, vector<16x16xf32>, vector<16x16xf32>, vector<16x16xf32>, vector<16x16xf32>, vector<16x16xf32>, vector<16x16xf32> -> vector<16x128xf32>
    %64 = arith.mulf %11, %63 : vector<16x128xf32>
    %c0_24 = arith.constant 0 : index
    %c0_25 = arith.constant 0 : index
    %65 = vector.load %arg9[%c0_24, %c0_25] : memref<16x128xf32, #tpu.memory_space<vmem>>, vector<16x128xf32>
    tpu.vector_store %arg9[%c0_24, %c0_25], %64 {strides = array<i32>} : memref<16x128xf32, #tpu.memory_space<vmem>>, vector<16x128xf32>,
    return
  }
  func.func @transform_0(%arg0: i32) -> (i32, i32) {
    %c0_i32 = arith.constant 0 : i32
    %c0_i32_0 = arith.constant 0 : i32
    return %arg0, %c0_i32 : i32, i32
  }
  func.func @transform_1(%arg0: i32) -> (i32, i32) {
    %c0_i32 = arith.constant 0 : i32
    %c0_i32_0 = arith.constant 0 : i32
    %c0_i32_1 = arith.constant 0 : i32
    return %c0_i32, %c0_i32_0 : i32, i32
  }
  func.func @transform_2(%arg0: i32) -> (i32, i32) {
    %c0_i32 = arith.constant 0 : i32
    %c0_i32_0 = arith.constant 0 : i32
    %c0_i32_1 = arith.constant 0 : i32
    return %c0_i32, %c0_i32_0 : i32, i32
  }
  func.func @transform_3(%arg0: i32) -> (i32, i32) {
    %c0_i32 = arith.constant 0 : i32
    %c0_i32_0 = arith.constant 0 : i32
    return %arg0, %c0_i32 : i32, i32
  }
  func.func @transform_4(%arg0: i32) -> (i32, i32) {
    %c0_i32 = arith.constant 0 : i32
    %c0_i32_0 = arith.constant 0 : i32
    %c0_i32_1 = arith.constant 0 : i32
    return %c0_i32, %c0_i32_0 : i32, i32
  }
  func.func @transform_5(%arg0: i32) -> (i32, i32) {
    %c0_i32 = arith.constant 0 : i32
    %c0_i32_0 = arith.constant 0 : i32
    %c0_i32_1 = arith.constant 0 : i32
    return %c0_i32, %c0_i32_0 : i32, i32
  }
  func.func @transform_6(%arg0: i32) -> (i32, i32) {
    %c0_i32 = arith.constant 0 : i32
    %c0_i32_0 = arith.constant 0 : i32
    %c0_i32_1 = arith.constant 0 : i32
    return %c0_i32, %c0_i32_0 : i32, i32
  }
  func.func @transform_7(%arg0: i32) -> (i32, i32) {
    %c0_i32 = arith.constant 0 : i32
    %c0_i32_0 = arith.constant 0 : i32
    %c0_i32_1 = arith.constant 0 : i32
    return %c0_i32, %c0_i32_0 : i32, i32
  }
  func.func @transform_8(%arg0: i32) -> (i32, i32) {
    %c0_i32 = arith.constant 0 : i32
    %c0_i32_0 = arith.constant 0 : i32
    return %arg0, %c0_i32 : i32, i32
  }
  func.func @transform_9(%arg0: i32) -> (i32, i32) {
    %c0_i32 = arith.constant 0 : i32
    %c0_i32_0 = arith.constant 0 : i32
    return %arg0, %c0_i32 : i32, i32
  }
}

</mosaic_0001>

<llo_original>
// kernel: tpu_custom_call.1
$region0: #{tpu_custom_call.1}
  #allocation0 [shape = 'u32[]', space=smem, size = 0x4, offset = 0x4, fixed_abs, tag = 'smem constant byte address 0x4 - core index']
  #allocation1 [shape = 'u32[144,128]{1,0:T(1,128)}', space=vmem, size = 0x12000, scoped, tag = 'internal scratch']
  %s0 = inlined_call_operand.vmem [shape: f32[16,3], index: 0, kind: input, shape index: {}]
  %s1 = inlined_call_operand.vmem [shape: f32[1,16], index: 1, kind: input, shape index: {}]
  %s2 = inlined_call_operand.vmem [shape: f32[1,16], index: 2, kind: input, shape index: {}]
  %s3 = inlined_call_operand.vmem [shape: f32[16,128], index: 3, kind: input, shape index: {}]
  %s4 = inlined_call_operand.vmem [shape: f32[128,2], index: 4, kind: input, shape index: {}]
  %s5 = inlined_call_operand.vmem [shape: f32[1,2], index: 5, kind: input, shape index: {}]
  %s6 = inlined_call_operand.vmem [shape: f32[2,128], index: 6, kind: input, shape index: {}]
  %s7 = inlined_call_operand.vmem [shape: f32[1,128], index: 7, kind: input, shape index: {}]
  %s8 = inlined_call_operand.hbm [shape: f32[16,128], index: 8, kind: output, shape index: {0}]
  %s9 = inlined_call_operand.vmem [shape: f32[16,2], index: 9, kind: output, shape index: {1}]
  %10 = xla_tuple %s8, %s9
  %s11 = sld [smem:[#allocation0]]
  $region50: #{tpu_custom_call.1} parent=0
    _
  %s13 = ssub.s32 1, %s11
  %s14 = scalar_select 0, %s13, %s11
  $region1: #{tpu_custom_call.1} parent=0
    #allocation2 [shape = 'u8[8192]{0}', space=vmem, size = 0x2000, scoped, tag = 'output window, operand 0, single buffered']
    #allocation3 [shape = 's32[1]{0}', space=sflag, size = 0x4, scoped, tag = 'scoped memory for tpu_custom_call.1']
    %15 = vsyncpa [#allocation3], 0
    // Predicated region
    $region2: #{tpu_custom_call.1} parent=1 // pred_check
      _
    $region3: #{tpu_custom_call.1} parent=1 // pred_check_branch
      %17 = sbr.rel (0) target = $region5
    $region4: #{tpu_custom_call.1} parent=1 // pred_region
      _
    $region5: #{tpu_custom_call.1} parent=1 // pred_fallthru
      _
    // Predicated region
    $region6: #{tpu_custom_call.1} parent=1 // pred_check
      _
    $region7: #{tpu_custom_call.1} parent=1 // pred_check_branch
      %19 = sbr.rel (0) target = $region9
    $region8: #{tpu_custom_call.1} parent=1 // pred_region
      _
    $region9: #{tpu_custom_call.1} parent=1 // pred_fallthru
      _
    // Predicated region
    $region10: #{tpu_custom_call.1} parent=1 // pred_check
      _
    $region11: #{tpu_custom_call.1} parent=1 // pred_check_branch
      %21 = sbr.rel (0) target = $region13
    $region12: #{tpu_custom_call.1} parent=1 // pred_region
      _
    $region13: #{tpu_custom_call.1} parent=1 // pred_fallthru
      _
    // Predicated region
    $region14: #{tpu_custom_call.1} parent=1 // pred_check
      _
    $region15: #{tpu_custom_call.1} parent=1 // pred_check_branch
      %23 = sbr.rel (0) target = $region17
    $region16: #{tpu_custom_call.1} parent=1 // pred_region
      _
    $region17: #{tpu_custom_call.1} parent=1 // pred_fallthru
      _
    // Predicated region
    $region18: #{tpu_custom_call.1} parent=1 // pred_check
      _
    $region19: #{tpu_custom_call.1} parent=1 // pred_check_branch
      %25 = sbr.rel (0) target = $region21
    $region20: #{tpu_custom_call.1} parent=1 // pred_region
      _
    $region21: #{tpu_custom_call.1} parent=1 // pred_fallthru
      _
    // Predicated region
    $region22: #{tpu_custom_call.1} parent=1 // pred_check
      _
    $region23: #{tpu_custom_call.1} parent=1 // pred_check_branch
      %27 = sbr.rel (0) target = $region25
    $region24: #{tpu_custom_call.1} parent=1 // pred_region
      _
    $region25: #{tpu_custom_call.1} parent=1 // pred_fallthru
      _
    // Predicated region
    $region26: #{tpu_custom_call.1} parent=1 // pred_check
      _
    $region27: #{tpu_custom_call.1} parent=1 // pred_check_branch
      %29 = sbr.rel (0) target = $region29
    $region28: #{tpu_custom_call.1} parent=1 // pred_region
      _
    $region29: #{tpu_custom_call.1} parent=1 // pred_fallthru
      _
    // Predicated region
    $region30: #{tpu_custom_call.1} parent=1 // pred_check
      _
    $region31: #{tpu_custom_call.1} parent=1 // pred_check_branch
      %31 = sbr.rel (0) target = $region33
    $region32: #{tpu_custom_call.1} parent=1 // pred_region
      _
    $region33: #{tpu_custom_call.1} parent=1 // pred_fallthru
      _
    %v32 = vld [vmem:[%s3] sm:$0xff]
    %v33 = vld [vmem:[%s3 + $0x8] sm:$0xff]
    %v34 = vld [vmem:[%s4] sm:$0xff]
    %v35 = vld [vmem:[%s4 + $0x8] sm:$0xff]
    %v36 = vld [vmem:[%s4 + $0x10] sm:$0xff]
    %v37 = vld [vmem:[%s4 + $0x18] sm:$0xff]
    %v38 = vld [vmem:[%s4 + $0x20] sm:$0xff]
    %v39 = vld [vmem:[%s4 + $0x28] sm:$0xff]
    %v40 = vld [vmem:[%s4 + $0x30] sm:$0xff]
    %v41 = vld [vmem:[%s4 + $0x38] sm:$0xff]
    %v42 = vld [vmem:[%s4 + $0x40] sm:$0xff]
    %v43 = vld [vmem:[%s4 + $0x48] sm:$0xff]
    %v44 = vld [vmem:[%s4 + $0x50] sm:$0xff]
    %v45 = vld [vmem:[%s4 + $0x58] sm:$0xff]
    %v46 = vld [vmem:[%s4 + $0x60] sm:$0xff]
    %v47 = vld [vmem:[%s4 + $0x68] sm:$0xff]
    %v48 = vld [vmem:[%s4 + $0x70] sm:$0xff]
    %v49 = vld [vmem:[%s4 + $0x78] sm:$0xff]
    %v50 = vld [vmem:[%s5] sm:$0x1]
    %v52 = vlaneseq
    %v53 = vshrl.u32 %v52, 7
    %v54 = vsub.s32 0, %v53
    %v55 = vrot.slane %v50, %v54
    %57 = vmatprep.subr.mxu0 0.0
    %58 = vmatpush1.msra.mxu0 %v49
    %59 = vmatprep.subr.mxu0 0.0
    %60 = vmatpush1.msra.mxu0 %v48
    %61 = vmatprep.subr.mxu0 0.0
    %62 = vmatpush1.msra.mxu0 %v47
    %63 = vmatprep.subr.mxu0 0.0
    %64 = vmatpush1.msra.mxu0 %v46
    %65 = vmatprep.subr.mxu0 0.0
    %66 = vmatpush1.msra.mxu0 %v45
    %67 = vmatprep.subr.mxu0 0.0
    %68 = vmatpush1.msra.mxu0 %v44
    %69 = vmatprep.subr.mxu0 0.0
    %70 = vmatpush1.msra.mxu0 %v43
    %71 = vmatprep.subr.mxu0 0.0
    %72 = vmatpush1.msra.mxu0 %v42
    %73 = vmatprep.subr.mxu0 0.0
    %74 = vmatpush1.msra.mxu0 %v41
    %75 = vmatprep.subr.mxu0 0.0
    %76 = vmatpush1.msra.mxu0 %v40
    %77 = vmatprep.subr.mxu0 0.0
    %78 = vmatpush1.msra.mxu0 %v39
    %79 = vmatprep.subr.mxu0 0.0
    %80 = vmatpush1.msra.mxu0 %v38
    %81 = vmatprep.subr.mxu0 0.0
    %82 = vmatpush1.msra.mxu0 %v37
    %83 = vmatprep.subr.mxu0 0.0
    %84 = vmatpush1.msra.mxu0 %v36
    %85 = vmatprep.subr.mxu0 0.0
    %86 = vmatpush1.msra.mxu0 %v35
    %87 = vmatprep.subr.mxu0 0.0
    %88 = vmatpush1.msra.mxu0 %v34
    %89 = vmatprep.subr.mxu0 0.0
    %90 = vmatpush2.msra.mxu0 0.0
    %91 = vmatprep.subr.mxu0 0.0
    %92 = vmatpush2.msra.mxu0 0.0
    %93 = vmatprep.subr.mxu0 0.0
    %94 = vmatpush2.msra.mxu0 0.0
    %95 = vmatprep.subr.mxu0 0.0
    %96 = vmatpush2.msra.mxu0 0.0
    %97 = vmatprep.subr.mxu0 0.0
    %98 = vmatpush2.msra.mxu0 0.0
    %99 = vmatprep.subr.mxu0 0.0
    %100 = vmatpush2.msra.mxu0 0.0
    %101 = vmatprep.subr.mxu0 0.0
    %102 = vmatpush2.msra.mxu0 0.0
    %103 = vmatprep.subr.mxu0 0.0
    %104 = vmatpush2.msra.mxu0 0.0
    %105 = vmatprep.subr.mxu0 0.0
    %106 = vmatpush2.msra.mxu0 0.0
    %107 = vmatprep.subr.mxu0 0.0
    %108 = vmatpush2.msra.mxu0 0.0
    %109 = vmatprep.subr.mxu0 0.0
    %110 = vmatpush2.msra.mxu0 0.0
    %111 = vmatprep.subr.mxu0 0.0
    %112 = vmatpush2.msra.mxu0 0.0
    %113 = vmatprep.subr.mxu0 0.0
    %114 = vmatpush2.msra.mxu0 0.0
    %115 = vmatprep.subr.mxu0 0.0
    %116 = vmatpush2.msra.mxu0 0.0
    %117 = vmatprep.subr.mxu0 0.0
    %118 = vmatpush2.msra.mxu0 0.0
    %119 = vmatprep.subr.mxu0 0.0
    %120 = vmatpush2.msra.mxu0 0.0
    %121 = vmatprep.mubr.f32.mxu0 0.0
    %122 = vmatmul.mubr.f32.gmra.mxu0 %v32
    %v123 = vpop.f32.mrf.mxu0
    %v124 = vadd.f32 %v55, %v123
    %v125 = vpop.f32.mrf.mxu0
    %126 = vmatprep.mubr.f32.mxu0 0.0
    %127 = vmatmul.mubr.f32.gmra.mxu0 %v33
    %v128 = vpop.f32.mrf.mxu0
    %v129 = vadd.f32 %v55, %v128
    %v130 = vpop.f32.mrf.mxu0
    %131 = vdwg.mxu0
    %vm132 = vcmask 15360
    %133 = vst.msk [vmem:[%s9] sm:$0xff] %vm132, %v124
    %134 = vst.msk [vmem:[%s9 + $0x8] sm:$0xff] %vm132, %v129
    %v135 = vld [vmem:[%s6] sm:$0x3]
    %v136 = vld [vmem:[%s7] sm:$0x1]
    %v138 = vlaneseq
    %v139 = vshrl.u32 %v138, 7
    %v140 = vsub.s32 0, %v139
    %v141 = vrot.slane %v136, %v140
    %v144 = vsel %vm132, %v124, 0
    %v147 = vsel %vm132, %v129, 0
    %vm149 = vcmask 1041408
    %v151 = vsel %vm149, %v135, 0
    %153 = vmatprep.subr.mxu0 0.0
    %154 = vmatpush1.msra.mxu0 0.0
    %155 = vmatprep.subr.mxu0 0.0
    %156 = vmatpush1.msra.mxu0 0.0
    %157 = vmatprep.subr.mxu0 0.0
    %158 = vmatpush1.msra.mxu0 0.0
    %159 = vmatprep.subr.mxu0 0.0
    %160 = vmatpush1.msra.mxu0 0.0
    %161 = vmatprep.subr.mxu0 0.0
    %162 = vmatpush1.msra.mxu0 0.0
    %163 = vmatprep.subr.mxu0 0.0
    %164 = vmatpush1.msra.mxu0 0.0
    %165 = vmatprep.subr.mxu0 0.0
    %166 = vmatpush1.msra.mxu0 0.0
    %167 = vmatprep.subr.mxu0 0.0
    %168 = vmatpush1.msra.mxu0 0.0
    %169 = vmatprep.subr.mxu0 0.0
    %170 = vmatpush1.msra.mxu0 0.0
    %171 = vmatprep.subr.mxu0 0.0
    %172 = vmatpush1.msra.mxu0 0.0
    %173 = vmatprep.subr.mxu0 0.0
    %174 = vmatpush1.msra.mxu0 0.0
    %175 = vmatprep.subr.mxu0 0.0
    %176 = vmatpush1.msra.mxu0 0.0
    %177 = vmatprep.subr.mxu0 0.0
    %178 = vmatpush1.msra.mxu0 0.0
    %179 = vmatprep.subr.mxu0 0.0
    %180 = vmatpush1.msra.mxu0 0.0
    %181 = vmatprep.subr.mxu0 0.0
    %182 = vmatpush1.msra.mxu0 0.0
    %183 = vmatprep.subr.mxu0 0.0
    %184 = vmatpush1.msra.mxu0 %v151
    %185 = vmatprep.subr.mxu0 0.0
    %186 = vmatpush2.msra.mxu0 0.0
    %187 = vmatprep.subr.mxu0 0.0
    %188 = vmatpush2.msra.mxu0 0.0
    %189 = vmatprep.subr.mxu0 0.0
    %190 = vmatpush2.msra.mxu0 0.0
    %191 = vmatprep.subr.mxu0 0.0
    %192 = vmatpush2.msra.mxu0 0.0
    %193 = vmatprep.subr.mxu0 0.0
    %194 = vmatpush2.msra.mxu0 0.0
    %195 = vmatprep.subr.mxu0 0.0
    %196 = vmatpush2.msra.mxu0 0.0
    %197 = vmatprep.subr.mxu0 0.0
    %198 = vmatpush2.msra.mxu0 0.0
    %199 = vmatprep.subr.mxu0 0.0
    %200 = vmatpush2.msra.mxu0 0.0
    %201 = vmatprep.subr.mxu0 0.0
    %202 = vmatpush2.msra.mxu0 0.0
    %203 = vmatprep.subr.mxu0 0.0
    %204 = vmatpush2.msra.mxu0 0.0
    %205 = vmatprep.subr.mxu0 0.0
    %206 = vmatpush2.msra.mxu0 0.0
    %207 = vmatprep.subr.mxu0 0.0
    %208 = vmatpush2.msra.mxu0 0.0
    %209 = vmatprep.subr.mxu0 0.0
    %210 = vmatpush2.msra.mxu0 0.0
    %211 = vmatprep.subr.mxu0 0.0
    %212 = vmatpush2.msra.mxu0 0.0
    %213 = vmatprep.subr.mxu0 0.0
    %214 = vmatpush2.msra.mxu0 0.0
    %215 = vmatprep.subr.mxu0 0.0
    %216 = vmatpush2.msra.mxu0 0.0
    %217 = vmatprep.mubr.f32.mxu0 0.0
    %218 = vmatmul.mubr.f32.gmra.mxu0 %v144
    %v219 = vpop.f32.mrf.mxu0
    %v220 = vadd.f32 %v141, %v219
    %v221 = vpop.f32.mrf.mxu0
    %222 = vmatprep.mubr.f32.mxu0 0.0
    %223 = vmatmul.mubr.f32.gmra.mxu0 %v147
    %v224 = vpop.f32.mrf.mxu0
    %v225 = vadd.f32 %v141, %v224
    %v226 = vpop.f32.mrf.mxu0
    %227 = vdwg.mxu0
    %230 = vrot.lane.b32.xlu0 %v220, 64
    %v231 = vpop.permute.xlu0 %230
    %232 = vrot.lane.b32.xlu0 %v225, 64
    %v233 = vpop.permute.xlu0 %232
    %v236 = vmax.f32 %v220, %v231
    %v237 = vmax.f32 %v225, %v233
    %v238 = vmin.f32 %v220, %v231
    %v239 = vmin.f32 %v225, %v233
    %242 = vrot.lane.b32.xlu0 %v236, 96
    %v243 = vpop.permute.xlu0 %242
    %244 = vrot.lane.b32.xlu0 %v237, 96
    %v245 = vpop.permute.xlu0 %244
    %v248 = vmax.f32 %v236, %v243
    %v249 = vmax.f32 %v237, %v245
    %252 = vrot.lane.b32.xlu0 %v238, 96
    %v253 = vpop.permute.xlu0 %252
    %254 = vrot.lane.b32.xlu0 %v239, 96
    %v255 = vpop.permute.xlu0 %254
    %v258 = vmin.f32 %v238, %v253
    %v259 = vmin.f32 %v239, %v255
    %262 = vrot.lane.b32.xlu0 %v248, 112
    %v263 = vpop.permute.xlu0 %262
    %264 = vrot.lane.b32.xlu0 %v249, 112
    %v265 = vpop.permute.xlu0 %264
    %v268 = vmax.f32 %v248, %v263
    %v269 = vmax.f32 %v249, %v265
    %272 = vrot.lane.b32.xlu0 %v258, 112
    %v273 = vpop.permute.xlu0 %272
    %274 = vrot.lane.b32.xlu0 %v259, 112
    %v275 = vpop.permute.xlu0 %274
    %v278 = vmin.f32 %v258, %v273
    %v279 = vmin.f32 %v259, %v275
    %v280 = vsub.f32 %v268, %v278
    %v281 = vsub.f32 %v269, %v279
    %v282 = vld [vmem:[%s0] sm:$0xff]
    %v283 = vld [vmem:[%s0 + $0x8] sm:$0xff]
    %v284 = vld [vmem:[%s1] sm:$0x1]
    %v285 = vld [vmem:[%s2] sm:$0x1]
    %v286 = vmul.f32 %v282, 2.0
    %v287 = vmul.f32 %v283, 2.0
    %v288 = vmul.f32 %v286, 1.442695
    %v289 = vpow.pop %v288
    %v290 = vmul.f32 %v287, 1.442695
    %v291 = vpow.pop %v290
    %v292 = vadd.f32 %v289, 0.01
    %v293 = vadd.f32 %v291, 0.01
    %v295 = vlaneseq
    %v296 = vshrl.u32 %v295, 7
    %v297 = vsub.s32 0, %v296
    %v298 = vrot.slane %v284, %v297
    %301 = vset.pattern.permute.xlu0 0
    %302 = vperm.xlu0 %301, %v282
    %v303 = vpop.permute.xlu0 %302
    %306 = vset.pattern.permute.xlu0 0
    %307 = vperm.xlu0 %306, %v283
    %v308 = vpop.permute.xlu0 %307
    %v310 = vsub.f32 %v298, %v303
    %v311 = vsub.f32 %v298, %v308
    %v312 = vmul.f32 %v310, %v310
    %v313 = vmul.f32 %v311, %v311
    %315 = vset.pattern.permute.xlu0 1
    %316 = vperm.xlu0 %315, %v292
    %v317 = vpop.permute.xlu0 %316
    %320 = vset.pattern.permute.xlu0 1
    %321 = vperm.xlu0 %320, %v293
    %v322 = vpop.permute.xlu0 %321
    %v324 = vadd.f32 %v317, %v312
    %v325 = vadd.f32 %v322, %v313
    %v327 = vlaneseq
    %v328 = vshrl.u32 %v327, 7
    %v329 = vsub.s32 0, %v328
    %v330 = vrot.slane %v285, %v329
    %332 = vset.pattern.permute.xlu0 2
    %333 = vperm.xlu0 %332, %v282
    %v334 = vpop.permute.xlu0 %333
    %336 = vset.pattern.permute.xlu0 2
    %337 = vperm.xlu0 %336, %v283
    %v338 = vpop.permute.xlu0 %337
    %v340 = vsub.f32 %v330, %v334
    %v341 = vsub.f32 %v330, %v338
    %v342 = vmul.f32 %v340, %v340
    %v343 = vmul.f32 %v341, %v341
    %v344 = vadd.f32 %v324, %v342
    %v345 = vadd.f32 %v325, %v343
    %v346 = vrsqrt.pop %v344
    %v347 = vrsqrt.pop %v345
    %v348 = vmul.f32 %v280, %v346
    %v349 = vmul.f32 %v281, %v347
    %vm350 = vcmask 130048
    %v351 = vsel %vm350, %v348, 0.0
    %352 = vadd.xlane.f32.xlu0 %v351
    %v353 = vpop.xlane.xlu0 %352
    %v354 = vsel %vm350, %v349, 0.0
    %355 = vadd.xlane.f32.xlu0 %v354
    %v356 = vpop.xlane.xlu0 %355
    %v357 = vmul.f32 %v346, %v346
    %v358 = vmul.f32 %v347, %v347
    %v359 = vsel %vm350, %v357, 0.0
    %360 = vadd.xlane.f32.xlu0 %v359
    %v361 = vpop.xlane.xlu0 %360
    %v362 = vsel %vm350, %v358, 0.0
    %363 = vadd.xlane.f32.xlu0 %v362
    %v364 = vpop.xlane.xlu0 %363
    %v365 = vrcp.pop %v361
    %v366 = vmul.f32 %v353, %v365
    %v367 = vrcp.pop %v364
    %v368 = vmul.f32 %v356, %v367
    %v369 = vmul.f32 %v366, %v346
    %v370 = vmul.f32 %v368, %v347
    %v371 = vrcp.pop %v280
    %v372 = vmul.f32 %v369, %v371
    %v373 = vrcp.pop %v281
    %v374 = vmul.f32 %v370, %v373
    %377 = vrot.lane.b32.xlu0 %v372, 16
    %v378 = vpop.permute.xlu0 %377
    %379 = vrot.lane.b32.xlu0 %v374, 16
    %v380 = vpop.permute.xlu0 %379
    %383 = vrot.lane.b32.xlu0 %v372, 32
    %v384 = vpop.permute.xlu0 %383
    %385 = vrot.lane.b32.xlu0 %v374, 32
    %v386 = vpop.permute.xlu0 %385
    %389 = vrot.lane.b32.xlu0 %v372, 48
    %v390 = vpop.permute.xlu0 %389
    %391 = vrot.lane.b32.xlu0 %v374, 48
    %v392 = vpop.permute.xlu0 %391
    %395 = vrot.lane.b32.xlu0 %v372, 64
    %v396 = vpop.permute.xlu0 %395
    %397 = vrot.lane.b32.xlu0 %v374, 64
    %v398 = vpop.permute.xlu0 %397
    %401 = vrot.lane.b32.xlu0 %v372, 80
    %v402 = vpop.permute.xlu0 %401
    %403 = vrot.lane.b32.xlu0 %v374, 80
    %v404 = vpop.permute.xlu0 %403
    %407 = vrot.lane.b32.xlu0 %v372, 96
    %v408 = vpop.permute.xlu0 %407
    %409 = vrot.lane.b32.xlu0 %v374, 96
    %v410 = vpop.permute.xlu0 %409
    %413 = vrot.lane.b32.xlu0 %v372, 112
    %v414 = vpop.permute.xlu0 %413
    %415 = vrot.lane.b32.xlu0 %v374, 112
    %v416 = vpop.permute.xlu0 %415
    %v419 = vsel %vm350, %v372, %v378
    %v420 = vsel %vm350, %v374, %v380
    %vm421 = vcmask 261120
    %v422 = vsel %vm421, %v419, %v384
    %v423 = vsel %vm421, %v420, %v386
    %vm424 = vcmask 392192
    %v425 = vsel %vm424, %v422, %v390
    %v426 = vsel %vm424, %v423, %v392
    %vm427 = vcmask 523264
    %v428 = vsel %vm427, %v425, %v396
    %v429 = vsel %vm427, %v426, %v398
    %vm430 = vcmask 654336
    %v431 = vsel %vm430, %v428, %v402
    %v432 = vsel %vm430, %v429, %v404
    %vm433 = vcmask 785408
    %v434 = vsel %vm433, %v431, %v408
    %v435 = vsel %vm433, %v432, %v410
    %vm436 = vcmask 916480
    %v437 = vsel %vm436, %v434, %v414
    %v438 = vsel %vm436, %v435, %v416
    %v439 = vmul.f32 %v220, %v437
    %v440 = vmul.f32 %v225, %v438
    %441 = vst [vmem:[#allocation2] sm:$0xff] %v439
    %442 = vst [vmem:[#allocation2 + $0x8] sm:$0xff] %v440
    // Predicated region
    $region34: #{tpu_custom_call.1} parent=1 // pred_check
      _
    $region35: #{tpu_custom_call.1} parent=1 // pred_check_branch
      %444 = sbr.rel (0) target = $region37
    $region36: #{tpu_custom_call.1} parent=1 // pred_region
      %s446 = ssub.s32 256, 256
      %447 = vsyncadd [#allocation3], %s446
      %s448 = sshll.u32 [#allocation2], 4
      %s449 = int_to_ptr.vmem [resolvable:$true] %s448
      %454 = dma.vmem_to_hbm [thread:$0]  %s449, 256, %s8, [#allocation3], 128, 128, 8
    $region37: #{tpu_custom_call.1} parent=1 // pred_fallthru
      _
    // Predicated region
    $region38: #{tpu_custom_call.1} parent=1 // pred_check
      _
    $region39: #{tpu_custom_call.1} parent=1 // pred_check_branch
      %456 = sbr.rel (0) target = $region41
    $region40: #{tpu_custom_call.1} parent=1 // pred_region
      _
    $region41: #{tpu_custom_call.1} parent=1 // pred_fallthru
      _
    // Predicated region
    $region42: #{tpu_custom_call.1} parent=1 // pred_check
      _
    $region43: #{tpu_custom_call.1} parent=1 // pred_check_branch
      %458 = sbr.rel (0) target = $region45
    $region44: #{tpu_custom_call.1} parent=1 // pred_region
      %459 = dma.done [#allocation3], 256
    $region45: #{tpu_custom_call.1} parent=1 // pred_fallthru
      _
    // Predicated region
    $region46: #{tpu_custom_call.1} parent=1 // pred_check
      _
    $region47: #{tpu_custom_call.1} parent=1 // pred_check_branch
      %461 = sbr.rel (0) target = $region49
    $region48: #{tpu_custom_call.1} parent=1 // pred_region
      _
    $region49: #{tpu_custom_call.1} parent=1 // pred_fallthru
      _
    %462 = vsyncpa [#allocation3], 1

</llo_original>
